<compile_context>
chip_gen: v7x
topology: tpu7x:2x2x1
jax: 0.10.0
libtpu: 0.0.40
codegen_flags: <defaults>
</compile_context>

<pallas_src>
import jax
import jax.numpy as jnp
from jax.experimental import pallas as pl
from jax.experimental.pallas import tpu as pltpu


def _round_up(v, m):
    return (v + m - 1) // m * m


def _vmem_limit(footprint_bytes):
    # Generous headroom over the real double-buffered footprint, capped well
    # below v5e/v6e's 128 MiB; tiny-tile configs stay far under v7x's 64 MiB.
    return int(min(100 * 1024 * 1024, 2 * footprint_bytes + (8 << 20)))


# ---------------------------------------------------------------------------
# Pass 1: reparameterized weight sample, fused transpose + cast.
# ---------------------------------------------------------------------------
def _sample_wt_kernel(loc_ref, rho_ref, eps_ref, wt_ref):
    # W = loc + softplus(rho) * eps   (f32), stored transposed ((inn, out)
    # layout) in the MXU feed dtype.  One pass over the weight data; the
    # matmul pass reads only this tensor.
    scale = jax.nn.softplus(rho_ref[...].astype(jnp.float32))
    w = loc_ref[...].astype(jnp.float32) + scale * eps_ref[...].astype(jnp.float32)
    wt_ref[...] = w.T.astype(wt_ref.dtype)


def _sample_wt(loc_p, rho_p, eps_p, *, tn, tk, kp, np_, out_dtype):
    n_t, k_t = np_ // tn, kp // tk
    out_bytes = jnp.dtype(out_dtype).itemsize
    footprint = 3 * 2 * tn * tk * 4 + 2 * tk * tn * out_bytes + 2 * tk * tn * 4
    return pl.pallas_call(
        _sample_wt_kernel,
        out_shape=jax.ShapeDtypeStruct((kp, np_), out_dtype),
        grid_spec=pltpu.PrefetchScalarGridSpec(
            num_scalar_prefetch=0,
            grid=(n_t, k_t),
            in_specs=[
                pl.BlockSpec((tn, tk), lambda n, k: (n, k)),   # weight_loc
                pl.BlockSpec((tn, tk), lambda n, k: (n, k)),   # weight_rho
                pl.BlockSpec((tn, tk), lambda n, k: (n, k)),   # eps
            ],
            out_specs=pl.BlockSpec((tk, tn), lambda n, k: (k, n)),  # W^T
        ),
        compiler_params=pltpu.CompilerParams(
            dimension_semantics=("parallel", "parallel"),
            vmem_limit_bytes=_vmem_limit(footprint),
        ),
    )(loc_p, rho_p, eps_p)


# ---------------------------------------------------------------------------
# Pass 2: tiled matmul  y = x @ W^T + bias.
# ---------------------------------------------------------------------------
def _linear_kernel(x_ref, wt_ref, b_ref, o_ref, acc_ref):
    @pl.when(pl.program_id(2) == 0)
    def _():
        acc_ref[...] = jnp.zeros_like(acc_ref)

    # (TM, TK) x (TK, TN); both operands already in the MXU feed dtype, f32
    # accumulation in the resident VMEM scratch.
    acc_ref[...] += jnp.dot(x_ref[...], wt_ref[...],
                            preferred_element_type=jnp.float32)

    @pl.when(pl.program_id(2) == pl.num_programs(2) - 1)
    def _():
        o_ref[...] = (acc_ref[...] + b_ref[...].astype(jnp.float32)).astype(o_ref.dtype)


def bayes_linear_forward(x, weight_loc, weight_rho, bias, eps, *,
                         mxu_bf16=True, tm=256, tn=256, tk=512):
    """x: (..., inn); weight_loc/weight_rho/eps: (out, inn); bias: (out,) or None."""
    *lead, inn = x.shape
    out_dim, inn_w = weight_loc.shape
    assert inn == inn_w

    x2d = x.reshape(-1, inn)
    m = x2d.shape[0]
    if bias is None:
        bias = jnp.zeros((out_dim,), jnp.float32)

    mxu_dtype = jnp.bfloat16 if mxu_bf16 else x.dtype

    # (8, 128)-granular tiles, clamped to the (padded) problem dims.
    tm = min(tm, _round_up(m, 8))
    tn = min(tn, _round_up(out_dim, 128))
    tk = min(tk, _round_up(inn, 128))
    mp, np_, kp = _round_up(m, tm), _round_up(out_dim, tn), _round_up(inn, tk)
    m_t, n_t, k_t = mp // tm, np_ // tn, kp // tk

    # Zero padding is exact: softplus(0)*0 + 0 = 0 in the padded weight region,
    # and padded x columns/rows only ever multiply those zeros (or are sliced off).
    pad2 = lambda a, r, c: jnp.pad(a, ((0, r - a.shape[0]), (0, c - a.shape[1])))

    # Operand casts happen here, not in the hot loop.
    x_p = pad2(x2d, mp, kp).astype(mxu_dtype)
    loc_p = pad2(weight_loc, np_, kp)
    rho_p = pad2(weight_rho, np_, kp)
    eps_p = pad2(eps, np_, kp)
    b_p = jnp.pad(bias.astype(jnp.float32), (0, np_ - out_dim)).reshape(1, np_)

    # Pass 1: sample the weight once (softplus + reparam + transpose + cast).
    wt_p = _sample_wt(loc_p, rho_p, eps_p, tn=tn, tk=tk, kp=kp, np_=np_,
                      out_dtype=mxu_dtype)

    in_bytes = jnp.dtype(mxu_dtype).itemsize
    out_bytes = jnp.dtype(x.dtype).itemsize
    mm_footprint = (2 * tm * tk * in_bytes      # x     (double-buffered)
                    + 2 * tk * tn * in_bytes    # W^T   (double-buffered)
                    + 2 * tn * 4                # bias  (double-buffered)
                    + 2 * tm * tn * out_bytes   # out   (double-buffered)
                    + tm * tn * 4)              # f32 accumulator

    y_p = pl.pallas_call(
        _linear_kernel,
        out_shape=jax.ShapeDtypeStruct((mp, np_), x.dtype),
        grid_spec=pltpu.PrefetchScalarGridSpec(
            num_scalar_prefetch=0,
            # n outermost, m middle (both independent), k innermost reduction
            # with the accumulator resident across it.
            grid=(n_t, m_t, k_t),
            in_specs=[
                pl.BlockSpec((tm, tk), lambda n, m, k: (m, k)),   # x
                pl.BlockSpec((tk, tn), lambda n, m, k: (k, n)),   # W^T
                pl.BlockSpec((1, tn), lambda n, m, k: (0, n)),    # bias
            ],
            out_specs=pl.BlockSpec((tm, tn), lambda n, m, k: (m, n)),
            scratch_shapes=[pltpu.VMEM((tm, tn), jnp.float32)],
        ),
        compiler_params=pltpu.CompilerParams(
            # No cross-M dependency any more -> both N and M are megacore-
            # parallel; only K (the reduction) is "arbitrary".
            dimension_semantics=("parallel", "parallel", "arbitrary"),
            vmem_limit_bytes=_vmem_limit(mm_footprint),
        ),
    )(x_p, wt_p, b_p)

    return y_p[:m, :out_dim].reshape(*lead, out_dim)


if __name__ == "__main__":
    # Module config: inn=32, out=16, dist='normal', prior loc=0, scale=1, use_bias=True
    INN, OUT = 32, 16
    BATCH, SEQ = 2, 8

    key = jax.random.PRNGKey(0)
    k_loc, k_rho, k_eps, k_x = jax.random.split(key, 4)

    # Deterministic parameter init mirroring __init__:
    #   weight_loc ~ Normal(0, 1).sample(), weight_rho ~ Normal(-3, 1).sample(), bias = 0
    weight_loc = 0.0 + 1.0 * jax.random.normal(k_loc, (OUT, INN), jnp.float32)
    weight_rho = -3.0 + 1.0 * jax.random.normal(k_rho, (OUT, INN), jnp.float32)
    bias = jnp.zeros((OUT,), jnp.float32)
    eps = jax.random.normal(k_eps, (OUT, INN), jnp.float32)   # rsample noise
    x = jax.random.normal(k_x, (BATCH, SEQ, INN), jnp.float32)

    w_ref = weight_loc + jax.nn.softplus(weight_rho) * eps

    # 1) f32 MXU path: matches the PyTorch f32 forward tightly.
    y32 = jax.block_until_ready(
        bayes_linear_forward(x, weight_loc, weight_rho, bias, eps, mxu_bf16=False))
    y_ref = x @ w_ref.T + bias
    assert y32.shape == (BATCH, SEQ, OUT)
    assert jnp.allclose(y32, y_ref, atol=1e-5, rtol=1e-5), \
        float(jnp.max(jnp.abs(y32 - y_ref)))

    # 2) bf16-fed MXU path (perf default): same math with bf16 operands and
    #    f32 accumulation.
    ybf = jax.block_until_ready(
        bayes_linear_forward(x, weight_loc, weight_rho, bias, eps, mxu_bf16=True))
    y_ref_bf = jnp.einsum("...i,oi->...o",
                          x.astype(jnp.bfloat16), w_ref.astype(jnp.bfloat16),
                          preferred_element_type=jnp.float32) + bias
    assert jnp.allclose(ybf, y_ref_bf, atol=2e-3, rtol=2e-3), \
        float(jnp.max(jnp.abs(ybf - y_ref_bf)))

    # 3) Multi-tile smoke test: exercises the (N, M, K) grid, K accumulation,
    #    padding, and the separate sampling pass across several weight blocks.
    M2, INN2, OUT2 = 320, 768, 384
    kk = jax.random.split(jax.random.PRNGKey(1), 4)
    wl2 = jax.random.normal(kk[0], (OUT2, INN2), jnp.float32)
    wr2 = -3.0 + jax.random.normal(kk[1], (OUT2, INN2), jnp.float32)
    ep2 = jax.random.normal(kk[2], (OUT2, INN2), jnp.float32)
    b2 = 0.1 * jax.random.normal(kk[3], (OUT2,), jnp.float32)
    x2 = jax.random.normal(jax.random.PRNGKey(2), (M2, INN2), jnp.float32)

    y2 = jax.block_until_ready(
        bayes_linear_forward(x2, wl2, wr2, b2, ep2, mxu_bf16=True))
    w2 = wl2 + jax.nn.softplus(wr2) * ep2
    y2_ref = jnp.einsum("mi,oi->mo",
                        x2.astype(jnp.bfloat16), w2.astype(jnp.bfloat16),
                        preferred_element_type=jnp.float32) + b2
    assert y2.shape == (M2, OUT2)
    assert jnp.allclose(y2, y2_ref, atol=1e-2, rtol=1e-2), \
        float(jnp.max(jnp.abs(y2 - y2_ref)))

    # 4) No-bias path (use_bias=False branch of the module).
    ynb = jax.block_until_ready(
        bayes_linear_forward(x, weight_loc, weight_rho, None, eps, mxu_bf16=False))
    assert jnp.allclose(ynb, x @ w_ref.T, atol=1e-5, rtol=1e-5)

    print("KERNEL_OK")
</pallas_src>

<mosaic_0001>
module attributes {stable_mosaic.version = 11 : i64} {
  func.func @_sample_wt_kernel(%arg0: i32, %arg1: i32, %arg2: memref<128x128xf32, #tpu.memory_space<vmem>>, %arg3: memref<128x128xf32, #tpu.memory_space<vmem>>, %arg4: memref<128x128xf32, #tpu.memory_space<vmem>>, %arg5: memref<128x128xf32, #tpu.memory_space<vmem>>) attributes {dimension_semantics = [#tpu.dimension_semantics<parallel>, #tpu.dimension_semantics<parallel>], iteration_bounds = array<i64: 1, 1>, scalar_prefetch = 0 : i64, scratch_operands = 0 : i64, tpu.core_type = #tpu.core_type<tc>, window_params = [{transform_indices = @transform_0, window_bounds = array<i64: 128, 128>}, {transform_indices = @transform_1, window_bounds = array<i64: 128, 128>}, {transform_indices = @transform_2, window_bounds = array<i64: 128, 128>}, {transform_indices = @transform_3, window_bounds = array<i64: 128, 128>}]} {
    %c0 = arith.constant 0 : index
    %c0_0 = arith.constant 0 : index
    %0 = vector.load %arg3[%c0, %c0_0] : memref<128x128xf32, #tpu.memory_space<vmem>>, vector<128x128xf32>
    %cst = arith.constant 0.000000e+00 : f32
    %1 = vector.broadcast %cst : f32 to vector<128x128xf32>
    %2 = arith.maximumf %0, %1 : vector<128x128xf32>
    %3 = vector.broadcast %cst : f32 to vector<128x128xf32>
    %4 = arith.subf %0, %3 : vector<128x128xf32>
    %5 = arith.cmpf one, %4, %4 : vector<128x128xf32>
    %6 = vector.broadcast %cst : f32 to vector<128x128xf32>
    %7 = arith.addf %0, %6 : vector<128x128xf32>
    %8 = math.absf %4 : vector<128x128xf32>
    %cst_1 = arith.constant 0.000000e+00 : f32
    %9 = vector.broadcast %cst_1 : f32 to vector<128x128xf32>
    %10 = arith.subf %9, %8 : vector<128x128xf32>
    %11 = math.exp %10 : vector<128x128xf32>
    %12 = math.log1p %11 : vector<128x128xf32>
    %13 = arith.addf %2, %12 : vector<128x128xf32>
    %14 = arith.select %5, %7, %13 : vector<128x128xi1>, vector<128x128xf32>
    %c0_2 = arith.constant 0 : index
    %c0_3 = arith.constant 0 : index
    %15 = vector.load %arg2[%c0_2, %c0_3] : memref<128x128xf32, #tpu.memory_space<vmem>>, vector<128x128xf32>
    %c0_4 = arith.constant 0 : index
    %c0_5 = arith.constant 0 : index
    %16 = vector.load %arg4[%c0_4, %c0_5] : memref<128x128xf32, #tpu.memory_space<vmem>>, vector<128x128xf32>
    %17 = arith.mulf %14, %16 : vector<128x128xf32>
    %18 = arith.addf %15, %17 : vector<128x128xf32>
    %19 = tpu.transpose %18, [1, 0] : vector<128x128xf32> -> vector<128x128xf32>
    %c0_6 = arith.constant 0 : index
    %c0_7 = arith.constant 0 : index
    %20 = vector.load %arg5[%c0_6, %c0_7] : memref<128x128xf32, #tpu.memory_space<vmem>>, vector<128x128xf32>
    tpu.vector_store %arg5[%c0_6, %c0_7], %19 {strides = array<i32>} : memref<128x128xf32, #tpu.memory_space<vmem>>, vector<128x128xf32>,
    return
  }
  func.func @transform_0(%arg0: i32, %arg1: i32) -> (i32, i32) {
    %c0_i32 = arith.constant 0 : i32
    return %arg0, %arg1 : i32, i32
  }
  func.func @transform_1(%arg0: i32, %arg1: i32) -> (i32, i32) {
    %c0_i32 = arith.constant 0 : i32
    return %arg0, %arg1 : i32, i32
  }
  func.func @transform_2(%arg0: i32, %arg1: i32) -> (i32, i32) {
    %c0_i32 = arith.constant 0 : i32
    return %arg0, %arg1 : i32, i32
  }
  func.func @transform_3(%arg0: i32, %arg1: i32) -> (i32, i32) {
    %c0_i32 = arith.constant 0 : i32
    return %arg1, %arg0 : i32, i32
  }
}

</mosaic_0001>

<llo_original>
// kernel: tpu_custom_call.1
$region0: #{tpu_custom_call.1}
  #allocation0 [shape = 'u32[]', space=smem, size = 0x4, offset = 0x4, fixed_abs, tag = 'smem constant byte address 0x4 - core index']
  #allocation1 [shape = 'u32[144,128]{1,0:T(1,128)}', space=vmem, size = 0x12000, scoped, tag = 'internal scratch']
  %s0 = inlined_call_operand.hbm [shape: f32[128,128], index: 0, kind: input, shape index: {}]
  %s1 = inlined_call_operand.hbm [shape: f32[128,128], index: 1, kind: input, shape index: {}]
  %s2 = inlined_call_operand.hbm [shape: f32[128,128], index: 2, kind: input, shape index: {}]
  %s3 = inlined_call_operand.hbm [shape: f32[128,128], index: 3, kind: output, shape index: {}]
  %s4 = sld [smem:[#allocation0]]
  $region34: #{tpu_custom_call.1} parent=0
    _
  %s6 = ssub.s32 1, %s4
  %s7 = scalar_select 0, %s6, %s4
  $region1: #{tpu_custom_call.1} parent=0
    #allocation2 [shape = 'u8[65536]{0}', space=vmem, size = 0x10000, scoped, tag = 'input window, operand 0, single buffered']
    #allocation3 [shape = 's32[1]{0}', space=sflag, size = 0x4, scoped, tag = 'scoped memory for tpu_custom_call.1']
    #allocation4 [shape = 's32[1]{0}', space=sflag, size = 0x4, scoped, tag = 'scoped memory for tpu_custom_call.1']
    #allocation5 [shape = 'u8[65536]{0}', space=vmem, size = 0x10000, scoped, tag = 'input window, operand 1, single buffered']
    #allocation6 [shape = 's32[1]{0}', space=sflag, size = 0x4, scoped, tag = 'scoped memory for tpu_custom_call.1']
    #allocation7 [shape = 'u8[65536]{0}', space=vmem, size = 0x10000, scoped, tag = 'input window, operand 2, single buffered']
    #allocation8 [shape = 'u8[65536]{0}', space=vmem, size = 0x10000, scoped, tag = 'output window, operand 0, single buffered']
    %8 = vsyncpa [#allocation3], 0
    %9 = vsyncpa [#allocation6], 0
    %10 = vsyncpa [#allocation4], 0
    // Predicated region
    $region2: #{tpu_custom_call.1} parent=1 // pred_check
      _
    $region3: #{tpu_custom_call.1} parent=1 // pred_check_branch
      %12 = sbr.rel (0) target = $region5
    $region4: #{tpu_custom_call.1} parent=1 // pred_region
      %s14 = ssub.s32 2048, 2048
      %15 = vsyncadd [#allocation3], %s14
      %s16 = sshll.u32 [#allocation2], 4
      %s17 = int_to_ptr.vmem [resolvable:$true] %s16
      %22 = dma.hbm_to_vmem [thread:$0]  %s0, 2048, %s17, [#allocation3], 128, 128, 8
    $region5: #{tpu_custom_call.1} parent=1 // pred_fallthru
      _
    // Predicated region
    $region6: #{tpu_custom_call.1} parent=1 // pred_check
      _
    $region7: #{tpu_custom_call.1} parent=1 // pred_check_branch
      %24 = sbr.rel (0) target = $region9
    $region8: #{tpu_custom_call.1} parent=1 // pred_region
      %s26 = ssub.s32 2048, 2048
      %27 = vsyncadd [#allocation6], %s26
      %s28 = sshll.u32 [#allocation5], 4
      %s29 = int_to_ptr.vmem [resolvable:$true] %s28
      %34 = dma.hbm_to_vmem [thread:$0]  %s1, 2048, %s29, [#allocation6], 128, 128, 8
    $region9: #{tpu_custom_call.1} parent=1 // pred_fallthru
      _
    // Predicated region
    $region10: #{tpu_custom_call.1} parent=1 // pred_check
      _
    $region11: #{tpu_custom_call.1} parent=1 // pred_check_branch
      %36 = sbr.rel (0) target = $region13
    $region12: #{tpu_custom_call.1} parent=1 // pred_region
      %s38 = ssub.s32 2048, 2048
      %39 = vsyncadd [#allocation6], %s38
      %s40 = sshll.u32 [#allocation7], 4
      %s41 = int_to_ptr.vmem [resolvable:$true] %s40
      %46 = dma.hbm_to_vmem [thread:$0]  %s2, 2048, %s41, [#allocation6], 128, 128, 8
    $region13: #{tpu_custom_call.1} parent=1 // pred_fallthru
      _
    // Predicated region
    $region14: #{tpu_custom_call.1} parent=1 // pred_check
      _
    $region15: #{tpu_custom_call.1} parent=1 // pred_check_branch
      %48 = sbr.rel (0) target = $region17
    $region16: #{tpu_custom_call.1} parent=1 // pred_region
      %49 = dma.done [#allocation3], 2048
    $region17: #{tpu_custom_call.1} parent=1 // pred_fallthru
      _
    // Predicated region
    $region18: #{tpu_custom_call.1} parent=1 // pred_check
      _
    $region19: #{tpu_custom_call.1} parent=1 // pred_check_branch
      %51 = sbr.rel (0) target = $region21
    $region20: #{tpu_custom_call.1} parent=1 // pred_region
      %52 = dma.done [#allocation6], 2048
    $region21: #{tpu_custom_call.1} parent=1 // pred_fallthru
      _
    // Predicated region
    $region22: #{tpu_custom_call.1} parent=1 // pred_check
      _
    $region23: #{tpu_custom_call.1} parent=1 // pred_check_branch
      %54 = sbr.rel (0) target = $region25
    $region24: #{tpu_custom_call.1} parent=1 // pred_region
      %55 = dma.done [#allocation6], 2048
    $region25: #{tpu_custom_call.1} parent=1 // pred_fallthru
      _
    %v56 = vld [vmem:[#allocation5] sm:$0xff]
    %v57 = vld [vmem:[#allocation5 + $0x8] sm:$0xff]
    %v58 = vld [vmem:[#allocation5 + $0x10] sm:$0xff]
    %v59 = vld [vmem:[#allocation5 + $0x18] sm:$0xff]
    %v60 = vld [vmem:[#allocation5 + $0x20] sm:$0xff]
    %v61 = vld [vmem:[#allocation5 + $0x28] sm:$0xff]
    %v62 = vld [vmem:[#allocation5 + $0x30] sm:$0xff]
    %v63 = vld [vmem:[#allocation5 + $0x38] sm:$0xff]
    %v64 = vld [vmem:[#allocation5 + $0x40] sm:$0xff]
    %v65 = vld [vmem:[#allocation5 + $0x48] sm:$0xff]
    %v66 = vld [vmem:[#allocation5 + $0x50] sm:$0xff]
    %v67 = vld [vmem:[#allocation5 + $0x58] sm:$0xff]
    %v68 = vld [vmem:[#allocation5 + $0x60] sm:$0xff]
    %v69 = vld [vmem:[#allocation5 + $0x68] sm:$0xff]
    %v70 = vld [vmem:[#allocation5 + $0x70] sm:$0xff]
    %v71 = vld [vmem:[#allocation5 + $0x78] sm:$0xff]
    %v72 = vmax.f32 %v56, 0.0
    %v73 = vmax.f32 %v57, 0.0
    %v74 = vmax.f32 %v58, 0.0
    %v75 = vmax.f32 %v59, 0.0
    %v76 = vmax.f32 %v60, 0.0
    %v77 = vmax.f32 %v61, 0.0
    %v78 = vmax.f32 %v62, 0.0
    %v79 = vmax.f32 %v63, 0.0
    %v80 = vmax.f32 %v64, 0.0
    %v81 = vmax.f32 %v65, 0.0
    %v82 = vmax.f32 %v66, 0.0
    %v83 = vmax.f32 %v67, 0.0
    %v84 = vmax.f32 %v68, 0.0
    %v85 = vmax.f32 %v69, 0.0
    %v86 = vmax.f32 %v70, 0.0
    %v87 = vmax.f32 %v71, 0.0
    %vm88 = vcmp.ne.f32.partialorder %v56, %v56
    %vm89 = vcmp.ne.f32.partialorder %v57, %v57
    %vm90 = vcmp.ne.f32.partialorder %v58, %v58
    %vm91 = vcmp.ne.f32.partialorder %v59, %v59
    %vm92 = vcmp.ne.f32.partialorder %v60, %v60
    %vm93 = vcmp.ne.f32.partialorder %v61, %v61
    %vm94 = vcmp.ne.f32.partialorder %v62, %v62
    %vm95 = vcmp.ne.f32.partialorder %v63, %v63
    %vm96 = vcmp.ne.f32.partialorder %v64, %v64
    %vm97 = vcmp.ne.f32.partialorder %v65, %v65
    %vm98 = vcmp.ne.f32.partialorder %v66, %v66
    %vm99 = vcmp.ne.f32.partialorder %v67, %v67
    %vm100 = vcmp.ne.f32.partialorder %v68, %v68
    %vm101 = vcmp.ne.f32.partialorder %v69, %v69
    %vm102 = vcmp.ne.f32.partialorder %v70, %v70
    %vm103 = vcmp.ne.f32.partialorder %v71, %v71
    %v104 = vadd.f32 %v56, 0.0
    %v105 = vadd.f32 %v57, 0.0
    %v106 = vadd.f32 %v58, 0.0
    %v107 = vadd.f32 %v59, 0.0
    %v108 = vadd.f32 %v60, 0.0
    %v109 = vadd.f32 %v61, 0.0
    %v110 = vadd.f32 %v62, 0.0
    %v111 = vadd.f32 %v63, 0.0
    %v112 = vadd.f32 %v64, 0.0
    %v113 = vadd.f32 %v65, 0.0
    %v114 = vadd.f32 %v66, 0.0
    %v115 = vadd.f32 %v67, 0.0
    %v116 = vadd.f32 %v68, 0.0
    %v117 = vadd.f32 %v69, 0.0
    %v118 = vadd.f32 %v70, 0.0
    %v119 = vadd.f32 %v71, 0.0
    %v120 = vand.u32 2147483647, %v56
    %v121 = vand.u32 2147483647, %v57
    %v122 = vand.u32 2147483647, %v58
    %v123 = vand.u32 2147483647, %v59
    %v124 = vand.u32 2147483647, %v60
    %v125 = vand.u32 2147483647, %v61
    %v126 = vand.u32 2147483647, %v62
    %v127 = vand.u32 2147483647, %v63
    %v128 = vand.u32 2147483647, %v64
    %v129 = vand.u32 2147483647, %v65
    %v130 = vand.u32 2147483647, %v66
    %v131 = vand.u32 2147483647, %v67
    %v132 = vand.u32 2147483647, %v68
    %v133 = vand.u32 2147483647, %v69
    %v134 = vand.u32 2147483647, %v70
    %v135 = vand.u32 2147483647, %v71
    %v136 = vsub.f32 0.0, %v120
    %v137 = vsub.f32 0.0, %v121
    %v138 = vsub.f32 0.0, %v122
    %v139 = vsub.f32 0.0, %v123
    %v140 = vsub.f32 0.0, %v124
    %v141 = vsub.f32 0.0, %v125
    %v142 = vsub.f32 0.0, %v126
    %v143 = vsub.f32 0.0, %v127
    %v144 = vsub.f32 0.0, %v128
    %v145 = vsub.f32 0.0, %v129
    %v146 = vsub.f32 0.0, %v130
    %v147 = vsub.f32 0.0, %v131
    %v148 = vsub.f32 0.0, %v132
    %v149 = vsub.f32 0.0, %v133
    %v150 = vsub.f32 0.0, %v134
    %v151 = vsub.f32 0.0, %v135
    %v152 = vmul.f32 %v136, 1.442695
    %v153 = vpow.pop %v152
    %v154 = vmul.f32 %v137, 1.442695
    %v155 = vpow.pop %v154
    %v156 = vmul.f32 %v138, 1.442695
    %v157 = vpow.pop %v156
    %v158 = vmul.f32 %v139, 1.442695
    %v159 = vpow.pop %v158
    %v160 = vmul.f32 %v140, 1.442695
    %v161 = vpow.pop %v160
    %v162 = vmul.f32 %v141, 1.442695
    %v163 = vpow.pop %v162
    %v164 = vmul.f32 %v142, 1.442695
    %v165 = vpow.pop %v164
    %v166 = vmul.f32 %v143, 1.442695
    %v167 = vpow.pop %v166
    %v168 = vmul.f32 %v144, 1.442695
    %v169 = vpow.pop %v168
    %v170 = vmul.f32 %v145, 1.442695
    %v171 = vpow.pop %v170
    %v172 = vmul.f32 %v146, 1.442695
    %v173 = vpow.pop %v172
    %v174 = vmul.f32 %v147, 1.442695
    %v175 = vpow.pop %v174
    %v176 = vmul.f32 %v148, 1.442695
    %v177 = vpow.pop %v176
    %v178 = vmul.f32 %v149, 1.442695
    %v179 = vpow.pop %v178
    %v180 = vmul.f32 %v150, 1.442695
    %v181 = vpow.pop %v180
    %v182 = vmul.f32 %v151, 1.442695
    %v183 = vpow.pop %v182
    %v184 = vadd.f32 %v153, 1.0
    %v185 = vlog2.pop %v184
    %v186 = vmul.f32 %v185, 0.6931472
    %v187 = vmul.f32 -0.5, %v153
    %v188 = vadd.f32 %v187, 1.0
    %v189 = vmul.f32 %v188, %v153
    %v190 = vand.u32 2147483647, %v153
    %vm191 = vcmp.lt.f32.partialorder %v190, 0.0004427343
    %v192 = vsel %vm191, %v189, %v186
    %v193 = vadd.f32 %v155, 1.0
    %v194 = vlog2.pop %v193
    %v195 = vmul.f32 %v194, 0.6931472
    %v196 = vmul.f32 -0.5, %v155
    %v197 = vadd.f32 %v196, 1.0
    %v198 = vmul.f32 %v197, %v155
    %v199 = vand.u32 2147483647, %v155
    %vm200 = vcmp.lt.f32.partialorder %v199, 0.0004427343
    %v201 = vsel %vm200, %v198, %v195
    %v202 = vadd.f32 %v157, 1.0
    %v203 = vlog2.pop %v202
    %v204 = vmul.f32 %v203, 0.6931472
    %v205 = vmul.f32 -0.5, %v157
    %v206 = vadd.f32 %v205, 1.0
    %v207 = vmul.f32 %v206, %v157
    %v208 = vand.u32 2147483647, %v157
    %vm209 = vcmp.lt.f32.partialorder %v208, 0.0004427343
    %v210 = vsel %vm209, %v207, %v204
    %v211 = vadd.f32 %v159, 1.0
    %v212 = vlog2.pop %v211
    %v213 = vmul.f32 %v212, 0.6931472
    %v214 = vmul.f32 -0.5, %v159
    %v215 = vadd.f32 %v214, 1.0
    %v216 = vmul.f32 %v215, %v159
    %v217 = vand.u32 2147483647, %v159
    %vm218 = vcmp.lt.f32.partialorder %v217, 0.0004427343
    %v219 = vsel %vm218, %v216, %v213
    %v220 = vadd.f32 %v161, 1.0
    %v221 = vlog2.pop %v220
    %v222 = vmul.f32 %v221, 0.6931472
    %v223 = vmul.f32 -0.5, %v161
    %v224 = vadd.f32 %v223, 1.0
    %v225 = vmul.f32 %v224, %v161
    %v226 = vand.u32 2147483647, %v161
    %vm227 = vcmp.lt.f32.partialorder %v226, 0.0004427343
    %v228 = vsel %vm227, %v225, %v222
    %v229 = vadd.f32 %v163, 1.0
    %v230 = vlog2.pop %v229
    %v231 = vmul.f32 %v230, 0.6931472
    %v232 = vmul.f32 -0.5, %v163
    %v233 = vadd.f32 %v232, 1.0
    %v234 = vmul.f32 %v233, %v163
    %v235 = vand.u32 2147483647, %v163
    %vm236 = vcmp.lt.f32.partialorder %v235, 0.0004427343
    %v237 = vsel %vm236, %v234, %v231
    %v238 = vadd.f32 %v165, 1.0
    %v239 = vlog2.pop %v238
    %v240 = vmul.f32 %v239, 0.6931472
    %v241 = vmul.f32 -0.5, %v165
    %v242 = vadd.f32 %v241, 1.0
    %v243 = vmul.f32 %v242, %v165
    %v244 = vand.u32 2147483647, %v165
    %vm245 = vcmp.lt.f32.partialorder %v244, 0.0004427343
    %v246 = vsel %vm245, %v243, %v240
    %v247 = vadd.f32 %v167, 1.0
    %v248 = vlog2.pop %v247
    %v249 = vmul.f32 %v248, 0.6931472
    %v250 = vmul.f32 -0.5, %v167
    %v251 = vadd.f32 %v250, 1.0
    %v252 = vmul.f32 %v251, %v167
    %v253 = vand.u32 2147483647, %v167
    %vm254 = vcmp.lt.f32.partialorder %v253, 0.0004427343
    %v255 = vsel %vm254, %v252, %v249
    %v256 = vadd.f32 %v169, 1.0
    %v257 = vlog2.pop %v256
    %v258 = vmul.f32 %v257, 0.6931472
    %v259 = vmul.f32 -0.5, %v169
    %v260 = vadd.f32 %v259, 1.0
    %v261 = vmul.f32 %v260, %v169
    %v262 = vand.u32 2147483647, %v169
    %vm263 = vcmp.lt.f32.partialorder %v262, 0.0004427343
    %v264 = vsel %vm263, %v261, %v258
    %v265 = vadd.f32 %v171, 1.0
    %v266 = vlog2.pop %v265
    %v267 = vmul.f32 %v266, 0.6931472
    %v268 = vmul.f32 -0.5, %v171
    %v269 = vadd.f32 %v268, 1.0
    %v270 = vmul.f32 %v269, %v171
    %v271 = vand.u32 2147483647, %v171
    %vm272 = vcmp.lt.f32.partialorder %v271, 0.0004427343
    %v273 = vsel %vm272, %v270, %v267
    %v274 = vadd.f32 %v173, 1.0
    %v275 = vlog2.pop %v274
    %v276 = vmul.f32 %v275, 0.6931472
    %v277 = vmul.f32 -0.5, %v173
    %v278 = vadd.f32 %v277, 1.0
    %v279 = vmul.f32 %v278, %v173
    %v280 = vand.u32 2147483647, %v173
    %vm281 = vcmp.lt.f32.partialorder %v280, 0.0004427343
    %v282 = vsel %vm281, %v279, %v276
    %v283 = vadd.f32 %v175, 1.0
    %v284 = vlog2.pop %v283
    %v285 = vmul.f32 %v284, 0.6931472
    %v286 = vmul.f32 -0.5, %v175
    %v287 = vadd.f32 %v286, 1.0
    %v288 = vmul.f32 %v287, %v175
    %v289 = vand.u32 2147483647, %v175
    %vm290 = vcmp.lt.f32.partialorder %v289, 0.0004427343
    %v291 = vsel %vm290, %v288, %v285
    %v292 = vadd.f32 %v177, 1.0
    %v293 = vlog2.pop %v292
    %v294 = vmul.f32 %v293, 0.6931472
    %v295 = vmul.f32 -0.5, %v177
    %v296 = vadd.f32 %v295, 1.0
    %v297 = vmul.f32 %v296, %v177
    %v298 = vand.u32 2147483647, %v177
    %vm299 = vcmp.lt.f32.partialorder %v298, 0.0004427343
    %v300 = vsel %vm299, %v297, %v294
    %v301 = vadd.f32 %v179, 1.0
    %v302 = vlog2.pop %v301
    %v303 = vmul.f32 %v302, 0.6931472
    %v304 = vmul.f32 -0.5, %v179
    %v305 = vadd.f32 %v304, 1.0
    %v306 = vmul.f32 %v305, %v179
    %v307 = vand.u32 2147483647, %v179
    %vm308 = vcmp.lt.f32.partialorder %v307, 0.0004427343
    %v309 = vsel %vm308, %v306, %v303
    %v310 = vadd.f32 %v181, 1.0
    %v311 = vlog2.pop %v310
    %v312 = vmul.f32 %v311, 0.6931472
    %v313 = vmul.f32 -0.5, %v181
    %v314 = vadd.f32 %v313, 1.0
    %v315 = vmul.f32 %v314, %v181
    %v316 = vand.u32 2147483647, %v181
    %vm317 = vcmp.lt.f32.partialorder %v316, 0.0004427343
    %v318 = vsel %vm317, %v315, %v312
    %v319 = vadd.f32 %v183, 1.0
    %v320 = vlog2.pop %v319
    %v321 = vmul.f32 %v320, 0.6931472
    %v322 = vmul.f32 -0.5, %v183
    %v323 = vadd.f32 %v322, 1.0
    %v324 = vmul.f32 %v323, %v183
    %v325 = vand.u32 2147483647, %v183
    %vm326 = vcmp.lt.f32.partialorder %v325, 0.0004427343
    %v327 = vsel %vm326, %v324, %v321
    %v328 = vadd.f32 %v72, %v192
    %v329 = vadd.f32 %v73, %v201
    %v330 = vadd.f32 %v74, %v210
    %v331 = vadd.f32 %v75, %v219
    %v332 = vadd.f32 %v76, %v228
    %v333 = vadd.f32 %v77, %v237
    %v334 = vadd.f32 %v78, %v246
    %v335 = vadd.f32 %v79, %v255
    %v336 = vadd.f32 %v80, %v264
    %v337 = vadd.f32 %v81, %v273
    %v338 = vadd.f32 %v82, %v282
    %v339 = vadd.f32 %v83, %v291
    %v340 = vadd.f32 %v84, %v300
    %v341 = vadd.f32 %v85, %v309
    %v342 = vadd.f32 %v86, %v318
    %v343 = vadd.f32 %v87, %v327
    %v344 = vsel %vm88, %v104, %v328
    %v345 = vsel %vm89, %v105, %v329
    %v346 = vsel %vm90, %v106, %v330
    %v347 = vsel %vm91, %v107, %v331
    %v348 = vsel %vm92, %v108, %v332
    %v349 = vsel %vm93, %v109, %v333
    %v350 = vsel %vm94, %v110, %v334
    %v351 = vsel %vm95, %v111, %v335
    %v352 = vsel %vm96, %v112, %v336
    %v353 = vsel %vm97, %v113, %v337
    %v354 = vsel %vm98, %v114, %v338
    %v355 = vsel %vm99, %v115, %v339
    %v356 = vsel %vm100, %v116, %v340
    %v357 = vsel %vm101, %v117, %v341
    %v358 = vsel %vm102, %v118, %v342
    %v359 = vsel %vm103, %v119, %v343
    %v360 = vld [vmem:[#allocation2] sm:$0xff]
    %v361 = vld [vmem:[#allocation2 + $0x8] sm:$0xff]
    %v362 = vld [vmem:[#allocation2 + $0x10] sm:$0xff]
    %v363 = vld [vmem:[#allocation2 + $0x18] sm:$0xff]
    %v364 = vld [vmem:[#allocation2 + $0x20] sm:$0xff]
    %v365 = vld [vmem:[#allocation2 + $0x28] sm:$0xff]
    %v366 = vld [vmem:[#allocation2 + $0x30] sm:$0xff]
    %v367 = vld [vmem:[#allocation2 + $0x38] sm:$0xff]
    %v368 = vld [vmem:[#allocation2 + $0x40] sm:$0xff]
    %v369 = vld [vmem:[#allocation2 + $0x48] sm:$0xff]
    %v370 = vld [vmem:[#allocation2 + $0x50] sm:$0xff]
    %v371 = vld [vmem:[#allocation2 + $0x58] sm:$0xff]
    %v372 = vld [vmem:[#allocation2 + $0x60] sm:$0xff]
    %v373 = vld [vmem:[#allocation2 + $0x68] sm:$0xff]
    %v374 = vld [vmem:[#allocation2 + $0x70] sm:$0xff]
    %v375 = vld [vmem:[#allocation2 + $0x78] sm:$0xff]
    %v376 = vld [vmem:[#allocation7] sm:$0xff]
    %v377 = vld [vmem:[#allocation7 + $0x8] sm:$0xff]
    %v378 = vld [vmem:[#allocation7 + $0x10] sm:$0xff]
    %v379 = vld [vmem:[#allocation7 + $0x18] sm:$0xff]
    %v380 = vld [vmem:[#allocation7 + $0x20] sm:$0xff]
    %v381 = vld [vmem:[#allocation7 + $0x28] sm:$0xff]
    %v382 = vld [vmem:[#allocation7 + $0x30] sm:$0xff]
    %v383 = vld [vmem:[#allocation7 + $0x38] sm:$0xff]
    %v384 = vld [vmem:[#allocation7 + $0x40] sm:$0xff]
    %v385 = vld [vmem:[#allocation7 + $0x48] sm:$0xff]
    %v386 = vld [vmem:[#allocation7 + $0x50] sm:$0xff]
    %v387 = vld [vmem:[#allocation7 + $0x58] sm:$0xff]
    %v388 = vld [vmem:[#allocation7 + $0x60] sm:$0xff]
    %v389 = vld [vmem:[#allocation7 + $0x68] sm:$0xff]
    %v390 = vld [vmem:[#allocation7 + $0x70] sm:$0xff]
    %v391 = vld [vmem:[#allocation7 + $0x78] sm:$0xff]
    %v392 = vmul.f32 %v344, %v376
    %v393 = vmul.f32 %v345, %v377
    %v394 = vmul.f32 %v346, %v378
    %v395 = vmul.f32 %v347, %v379
    %v396 = vmul.f32 %v348, %v380
    %v397 = vmul.f32 %v349, %v381
    %v398 = vmul.f32 %v350, %v382
    %v399 = vmul.f32 %v351, %v383
    %v400 = vmul.f32 %v352, %v384
    %v401 = vmul.f32 %v353, %v385
    %v402 = vmul.f32 %v354, %v386
    %v403 = vmul.f32 %v355, %v387
    %v404 = vmul.f32 %v356, %v388
    %v405 = vmul.f32 %v357, %v389
    %v406 = vmul.f32 %v358, %v390
    %v407 = vmul.f32 %v359, %v391
    %v408 = vadd.f32 %v360, %v392
    %v409 = vadd.f32 %v361, %v393
    %v410 = vadd.f32 %v362, %v394
    %v411 = vadd.f32 %v363, %v395
    %v412 = vadd.f32 %v364, %v396
    %v413 = vadd.f32 %v365, %v397
    %v414 = vadd.f32 %v366, %v398
    %v415 = vadd.f32 %v367, %v399
    %v416 = vadd.f32 %v368, %v400
    %v417 = vadd.f32 %v369, %v401
    %v418 = vadd.f32 %v370, %v402
    %v419 = vadd.f32 %v371, %v403
    %v420 = vadd.f32 %v372, %v404
    %v421 = vadd.f32 %v373, %v405
    %v422 = vadd.f32 %v374, %v406
    %v423 = vadd.f32 %v375, %v407
    %424 = vxpose.xlu0.b32.start [1/16] %v408, 128
    %425 = vxpose.xlu0.b32.cont [2/16] %v409, 128
    %426 = vxpose.xlu0.b32.cont [3/16] %v410, 128
    %427 = vxpose.xlu0.b32.cont [4/16] %v411, 128
    %428 = vxpose.xlu0.b32.cont [5/16] %v412, 128
    %429 = vxpose.xlu0.b32.cont [6/16] %v413, 128
    %430 = vxpose.xlu0.b32.cont [7/16] %v414, 128
    %431 = vxpose.xlu0.b32.cont [8/16] %v415, 128
    %432 = vxpose.xlu0.b32.cont [9/16] %v416, 128
    %433 = vxpose.xlu0.b32.cont [10/16] %v417, 128
    %434 = vxpose.xlu0.b32.cont [11/16] %v418, 128
    %435 = vxpose.xlu0.b32.cont [12/16] %v419, 128
    %436 = vxpose.xlu0.b32.cont [13/16] %v420, 128
    %437 = vxpose.xlu0.b32.cont [14/16] %v421, 128
    %438 = vxpose.xlu0.b32.cont [15/16] %v422, 128
    %439 = vxpose.xlu0.b32.end [16/16] %v423, 128
    %v440 = vpop.trf.xlu0
    %v441 = vpop.trf.xlu0
    %v442 = vpop.trf.xlu0
    %v443 = vpop.trf.xlu0
    %v444 = vpop.trf.xlu0
    %v445 = vpop.trf.xlu0
    %v446 = vpop.trf.xlu0
    %v447 = vpop.trf.xlu0
    %v448 = vpop.trf.xlu0
    %v449 = vpop.trf.xlu0
    %v450 = vpop.trf.xlu0
    %v451 = vpop.trf.xlu0
    %v452 = vpop.trf.xlu0
    %v453 = vpop.trf.xlu0
    %v454 = vpop.trf.xlu0
    %v455 = vpop.trf.xlu0
    %456 = vst [vmem:[#allocation8] sm:$0xff] %v440
    %457 = vst [vmem:[#allocation8 + $0x8] sm:$0xff] %v441
    %458 = vst [vmem:[#allocation8 + $0x10] sm:$0xff] %v442
    %459 = vst [vmem:[#allocation8 + $0x18] sm:$0xff] %v443
    %460 = vst [vmem:[#allocation8 + $0x20] sm:$0xff] %v444
    %461 = vst [vmem:[#allocation8 + $0x28] sm:$0xff] %v445
    %462 = vst [vmem:[#allocation8 + $0x30] sm:$0xff] %v446
    %463 = vst [vmem:[#allocation8 + $0x38] sm:$0xff] %v447
    %464 = vst [vmem:[#allocation8 + $0x40] sm:$0xff] %v448
    %465 = vst [vmem:[#allocation8 + $0x48] sm:$0xff] %v449
    %466 = vst [vmem:[#allocation8 + $0x50] sm:$0xff] %v450
    %467 = vst [vmem:[#allocation8 + $0x58] sm:$0xff] %v451
    %468 = vst [vmem:[#allocation8 + $0x60] sm:$0xff] %v452
    %469 = vst [vmem:[#allocation8 + $0x68] sm:$0xff] %v453
    %470 = vst [vmem:[#allocation8 + $0x70] sm:$0xff] %v454
    %471 = vst [vmem:[#allocation8 + $0x78] sm:$0xff] %v455
    // Predicated region
    $region26: #{tpu_custom_call.1} parent=1 // pred_check
      _
    $region27: #{tpu_custom_call.1} parent=1 // pred_check_branch
      %473 = sbr.rel (0) target = $region29
    $region28: #{tpu_custom_call.1} parent=1 // pred_region
      %s475 = ssub.s32 2048, 2048
      %476 = vsyncadd [#allocation4], %s475
      %s477 = sshll.u32 [#allocation8], 4
      %s478 = int_to_ptr.vmem [resolvable:$true] %s477
      %483 = dma.vmem_to_hbm [thread:$0]  %s478, 2048, %s3, [#allocation4], 128, 128, 8
    $region29: #{tpu_custom_call.1} parent=1 // pred_fallthru
      _
    // Predicated region
    $region30: #{tpu_custom_call.1} parent=1 // pred_check
      _
    $region31: #{tpu_custom_call.1} parent=1 // pred_check_branch
      %485 = sbr.rel (0) target = $region33
    $region32: #{tpu_custom_call.1} parent=1 // pred_region
      %486 = dma.done [#allocation4], 2048
    $region33: #{tpu_custom_call.1} parent=1 // pred_fallthru
      _
    %487 = vsyncpa [#allocation3], 1
    %488 = vsyncpa [#allocation6], 1
    %489 = vsyncpa [#allocation4], 1

</llo_original>
